<compile_context>
chip_gen: v7x
topology: tpu7x:2x2x1
jax: 0.10.0
libtpu: 0.0.40
codegen_flags: <defaults>
</compile_context>

<pallas_src>
import functools

import numpy as np

import jax
import jax.numpy as jnp
from jax import lax
from jax.experimental import pallas as pl
from jax.experimental.pallas import tpu as pltpu

BLANK_IDX = 0


def _ctc_greedy_kernel(len_ref, feat_ref, tokens_ref, scores_ref, *,
                       compare_native: bool):
    # len_ref:    (tB, 1)      int32   (VMEM)
    # feat_ref:   (tB, V, tT)  native dtype (vocab on sublanes, time on lanes)
    # tokens_ref: (tB, tT)     int32
    # scores_ref: (1, tB, 1)   float32, resident across the innermost T axis
    hi = pl.program_id(1)       # megacore T-split index (size 1 or 2)
    ti = pl.program_id(2)       # T-tile index within the split (reduction axis)

    @pl.when(ti == 0)
    def _init():
        scores_ref[...] = jnp.zeros_like(scores_ref)

    tB, Vdim, tT = feat_ref.shape
    CH = 256 if (tT % 256 == 0) else tT          # timestep sub-chunk (lanes)
    n_chunks = tT // CH

    lens = len_ref[...]                          # (tB, 1) int32
    # Global time origin of this tile. For the clamped duplicate tail tile on
    # the T-split path this lands >= T, so the length mask zeroes its score
    # contribution and its (identical) tokens rewrite is harmless.
    t_base = (hi * pl.num_programs(2) + ti) * tT

    def _chunk(c, carry):
        c0 = c * CH
        x = feat_ref[:, :, pl.ds(c0, CH)]        # (tB, V, CH), streaming dtype
        if not compare_native:                   # v5e: keep everything in f32
            x = x.astype(jnp.float32)

        # One vocab max, reused for argmax and for the log-softmax max.
        m = jnp.max(x, axis=1, keepdims=True)    # (tB, 1, CH)

        # argmax over vocab (== argmax of log_softmax); first occurrence on
        # ties via min over tied indices. Padded sublanes (29->32) are masked
        # out of the logical-extent reductions by Mosaic.
        v_iota = lax.broadcasted_iota(jnp.int32, (1, Vdim, 1), 1)
        toks = jnp.min(jnp.where(x == m, v_iota, Vdim), axis=1)     # (tB, CH)
        tokens_ref[:, pl.ds(c0, CH)] = toks.astype(jnp.int32)

        # max_v log_softmax = -log(sum_v exp(x - m)); exp/sum/log stay in f32.
        xf = x.astype(jnp.float32)
        mf = m.astype(jnp.float32)
        max_scores = -jnp.log(jnp.sum(jnp.exp(xf - mf), axis=1))    # (tB, CH)

        # Length-masked accumulation of the max log-probs.
        t_iota = (t_base + c0) + lax.broadcasted_iota(jnp.int32, (tB, CH), 1)
        masked = jnp.where(t_iota < lens, max_scores, 0.0)
        part = jnp.sum(masked, axis=-1, keepdims=True)              # (tB, 1)
        scores_ref[...] += part[None, :, :]
        return carry

    lax.fori_loop(0, n_chunks, _chunk, 0, unroll=True)


def _default_config():
    """Per-generation tile / VMEM sizing and compute-dtype policy."""
    kind = ""
    try:
        kind = jax.devices()[0].device_kind.lower()
    except Exception:
        pass
    if "v7" in kind:
        # 64 MiB physical / 32 MiB scoped VMEM, 2 TensorCores per chip:
        # larger T tiles + megacore T-split for small decode batches.
        return dict(tile_b=8, tile_t=2048, vmem=32 * 1024 * 1024,
                    want_split=True, compare_native=True)
    if "v5" in kind:
        # v5e has no bf16 VPU/EUP path: keep all in-kernel math in f32.
        return dict(tile_b=8, tile_t=1024, vmem=16 * 1024 * 1024,
                    want_split=False, compare_native=False)
    # v6e and unknown chips.
    return dict(tile_b=8, tile_t=1024, vmem=16 * 1024 * 1024,
                want_split=False, compare_native=True)


def ctc_greedy_pallas(feature, lengths, *, tile_b=None, tile_t=None,
                      vmem_limit_bytes=None, t_splits=None):
    """feature: (B, T, V) any float dtype; lengths: (B,) int
    -> (tokens (B, T) int8, scores (B, 1) float32)."""
    B, T, V = feature.shape
    cfg = _default_config()
    tile_b = cfg["tile_b"] if tile_b is None else tile_b
    tile_t = cfg["tile_t"] if tile_t is None else tile_t
    vmem_limit_bytes = cfg["vmem"] if vmem_limit_bytes is None else vmem_limit_bytes

    # Batch tile: full B, or a multiple of 8 (sublane constraint on 2D outputs).
    tB = min(tile_b, B)
    if tB != B and tB % 8 != 0:
        tB = B
    # Time tile: full T, or a multiple of 128 (lane constraint on the outputs).
    tT = min(tile_t, T)
    if tT != T and tT % 128 != 0:
        tT = max(128, (tT // 128) * 128)
        if tT > T:
            tT = T

    n_tb = pl.cdiv(B, tB)
    n_tt = pl.cdiv(T, tT)

    # Megacore T-split (v7x): guarantee >= 2 units of parallel work when the
    # whole batch fits a single B tile. Capped at 2 (two TensorCores), which
    # also guarantees only the last split can hit the clamped duplicate tile.
    if t_splits is None:
        t_splits = 2 if (cfg["want_split"] and n_tb == 1) else 1
    t_splits = max(1, min(int(t_splits), 2))
    if t_splits > 1 and n_tt < t_splits:
        if T >= t_splits * 128:
            tT = max(128, ((T // t_splits) // 128) * 128)
            n_tt = pl.cdiv(T, tT)
        if n_tt < t_splits:
            t_splits = 1
    nt = pl.cdiv(n_tt, t_splits)          # T tiles per split

    def t_block(hi, ti):
        idx = hi * nt + ti
        if t_splits > 1:
            # Clamp the (possibly) out-of-range tail tile of the last split to
            # the last valid T block; its score contribution is length-masked
            # to zero inside the kernel and its tokens rewrite is identical.
            idx = jnp.minimum(idx, n_tt - 1)
        return idx

    # Vocab on sublanes, time on lanes (pads 29->32 instead of 29->128).
    feat_bvt = jnp.transpose(feature, (0, 2, 1))            # (B, V, T)
    lengths_2d = lengths.astype(jnp.int32).reshape(B, 1)

    kernel = functools.partial(_ctc_greedy_kernel,
                               compare_native=cfg["compare_native"])

    grid = (n_tb, t_splits, nt)
    tokens, part_scores = pl.pallas_call(
        kernel,
        out_shape=(
            jax.ShapeDtypeStruct((B, T), jnp.int32),
            jax.ShapeDtypeStruct((t_splits, B, 1), jnp.float32),
        ),
        grid=grid,
        in_specs=[
            pl.BlockSpec((tB, 1), lambda bi, hi, ti: (bi, 0)),
            pl.BlockSpec((tB, V, tT), lambda bi, hi, ti: (bi, 0, t_block(hi, ti))),
        ],
        out_specs=(
            pl.BlockSpec((tB, tT), lambda bi, hi, ti: (bi, t_block(hi, ti))),
            # Per-(batch-tile, split) partial score block stays resident in
            # VMEM across the innermost T axis and acts as the accumulator.
            pl.BlockSpec((1, tB, 1), lambda bi, hi, ti: (hi, bi, 0)),
        ),
        compiler_params=pltpu.CompilerParams(
            dimension_semantics=("parallel", "parallel", "arbitrary"),
            vmem_limit_bytes=vmem_limit_bytes,
        ),
    )(lengths_2d, feat_bvt)   # feature streamed in its native dtype

    scores = jnp.sum(part_scores, axis=0)                    # (B, 1) f32
    # int8 tokens (V=29 fits): 4x smaller D2H copy for the host-side collapse.
    return tokens.astype(jnp.int8), scores


def ctc_collapse_host(tokens, lengths, blank_idx=BLANK_IDX):
    """Vectorized CTC greedy collapse (drop repeats and blanks).

    Equivalent to the PyTorch per-timestep loop: with prev[t] = tokens[t-1]
    (prev[0] = blank), a token is emitted iff token != blank and token != prev
    (the `current_token == blank_idx` branch is subsumed, since prev == blank
    and token != blank already implies token != prev).
    """
    tok = np.asarray(jax.device_get(tokens))
    lens = np.asarray(jax.device_get(lengths)).astype(np.int64).reshape(-1)
    B, T = tok.shape
    prev = np.concatenate(
        [np.full((B, 1), blank_idx, dtype=tok.dtype), tok[:, :-1]], axis=1)
    valid = np.arange(T)[None, :] < lens[:, None]
    emit = (tok != blank_idx) & (tok != prev) & valid
    return [[int(v) for v in tok[b, emit[b]]] for b in range(B)]


def _collapse_reference_loop(tokens, lengths, blank_idx=BLANK_IDX):
    """Literal port of the PyTorch double loop, used to validate the collapse."""
    tok = np.asarray(jax.device_get(tokens))
    lens = np.asarray(jax.device_get(lengths)).reshape(-1)
    prediction = []
    for b in range(tok.shape[0]):
        pred = []
        current_token = blank_idx
        for t in tok[b, : int(lens[b])].tolist():
            if (t != current_token or current_token == blank_idx) and t != blank_idx:
                pred.append(int(t))
            current_token = t
        prediction.append(pred)
    return prediction


def ctc_decoder_forward(feature, lengths, beam_width: int = 1):
    """Equivalent of CTCDecoder.forward for beam_width <= 1 (greedy path)."""
    if beam_width > 1:
        # TODO(synk): sequential prefix-dict beam search has no fixed-shape
        # Pallas equivalent; only the greedy path is implemented on device.
        raise NotImplementedError("beamsearch_decode not implemented in Pallas")
    tokens, scores = ctc_greedy_pallas(feature, lengths)
    jax.block_until_ready((tokens, scores))
    prediction = ctc_collapse_host(tokens, lengths)
    logp_scores = [float(s) for s in jax.device_get(scores)[:, 0]]
    return prediction, logp_scores


def _reference_jax(feature, lengths):
    logp = jax.nn.log_softmax(feature.astype(jnp.float32), axis=-1)
    max_scores = jnp.max(logp, axis=-1)
    max_tokens = jnp.argmax(logp, axis=-1).astype(jnp.int32)
    t_iota = jnp.arange(feature.shape[1])[None, :]
    mask = t_iota < lengths[:, None]
    scores = jnp.sum(jnp.where(mask, max_scores, 0.0), axis=-1)
    return max_tokens, scores


if __name__ == "__main__":
    key = jax.random.PRNGKey(0)

    # --- small single-tile case, module default vocab_size=29 ---
    B, T, V = 2, 8, 29
    feature = jax.random.normal(key, (B, T, V), dtype=jnp.float32)
    lengths = jnp.array([8, 5], dtype=jnp.int32)

    tokens, scores = ctc_greedy_pallas(feature, lengths)
    jax.block_until_ready((tokens, scores))
    ref_tokens, ref_scores = _reference_jax(feature, lengths)
    assert (jax.device_get(tokens) == jax.device_get(ref_tokens)).all()
    assert jnp.allclose(scores[:, 0], ref_scores, atol=1e-4)

    prediction, logp_scores = ctc_decoder_forward(feature, lengths, beam_width=1)
    assert prediction == _collapse_reference_loop(tokens, lengths)
    assert all(abs(a - b) < 1e-3 for a, b in
               zip(logp_scores, [float(s) for s in jax.device_get(ref_scores)]))

    # --- multi-tile bf16 case: (B, T) grid, partial last T block, forced
    #     two-way megacore T-split (clamped duplicate tail tile), int8 tokens ---
    k1, k2 = jax.random.split(key)
    B2, T2, V2 = 4, 300, 29
    feat2 = jax.random.normal(k1, (B2, T2, V2), dtype=jnp.float32).astype(jnp.bfloat16)
    len2 = jnp.array([300, 257, 100, 1], dtype=jnp.int32)
    tok2, sc2 = ctc_greedy_pallas(feat2, len2, tile_b=8, tile_t=128, t_splits=2)
    jax.block_until_ready((tok2, sc2))
    ref_tok2, ref_sc2 = _reference_jax(feat2, len2)
    assert (jax.device_get(tok2) == jax.device_get(ref_tok2)).all()
    assert jnp.allclose(sc2[:, 0], ref_sc2, atol=1e-2, rtol=1e-4)
    assert ctc_collapse_host(tok2, len2) == _collapse_reference_loop(tok2, len2)

    # --- in-kernel chunked (256-lane sub-slice) path + partial last T block ---
    B3, T3, V3 = 3, 640, 29
    feat3 = jax.random.normal(k2, (B3, T3, V3), dtype=jnp.bfloat16)
    len3 = jnp.array([640, 513, 37], dtype=jnp.int32)
    tok3, sc3 = ctc_greedy_pallas(feat3, len3, tile_t=512)
    jax.block_until_ready((tok3, sc3))
    ref_tok3, ref_sc3 = _reference_jax(feat3, len3)
    assert (jax.device_get(tok3) == jax.device_get(ref_tok3)).all()
    assert jnp.allclose(sc3[:, 0], ref_sc3, atol=1e-2, rtol=1e-4)
    assert ctc_collapse_host(tok3, len3) == _collapse_reference_loop(tok3, len3)

    print("KERNEL_OK")
</pallas_src>

<mosaic_0001>
module attributes {stable_mosaic.version = 11 : i64} {
  func.func @_ctc_greedy_kernel(%arg0: i32, %arg1: i32, %arg2: i32, %arg3: memref<2x1xi32, #tpu.memory_space<vmem>>, %arg4: memref<2x29x8xf32, #tpu.memory_space<vmem>>, %arg5: memref<2x8xi32, #tpu.memory_space<vmem>>, %arg6: memref<1x2x1xf32, #tpu.memory_space<vmem>>) attributes {dimension_semantics = [#tpu.dimension_semantics<parallel>, #tpu.dimension_semantics<parallel>, #tpu.dimension_semantics<arbitrary>], iteration_bounds = array<i64: 1, 1, 1>, scalar_prefetch = 0 : i64, scratch_operands = 0 : i64, tpu.core_type = #tpu.core_type<tc>, window_params = [{transform_indices = @transform_0, window_bounds = array<i64: 2, 1>}, {transform_indices = @transform_1, window_bounds = array<i64: 2, 29, 8>}, {transform_indices = @transform_2, window_bounds = array<i64: 2, 8>}, {transform_indices = @transform_3, window_bounds = array<i64: 1, 2, 1>}]} {
    %c0_i32 = arith.constant 0 : i32
    %0 = arith.cmpi eq, %arg2, %c0_i32 : i32
    %1 = arith.extui %0 : i1 to i32
    %c0_i32_0 = arith.constant 0 : i32
    %2 = arith.cmpi ne, %1, %c0_i32_0 : i32
    scf.if %2 {
      %cst_19 = arith.constant 0.000000e+00 : f32
      %43 = vector.broadcast %cst_19 : f32 to vector<1x2x1xf32>
      %c0_20 = arith.constant 0 : index
      %c0_21 = arith.constant 0 : index
      %c0_22 = arith.constant 0 : index
      %44 = vector.load %arg6[%c0_20, %c0_21, %c0_22] : memref<1x2x1xf32, #tpu.memory_space<vmem>>, vector<1x2x1xf32>
      tpu.vector_store %arg6[%c0_20, %c0_21, %c0_22], %43 {strides = array<i32>} : memref<1x2x1xf32, #tpu.memory_space<vmem>>, vector<1x2x1xf32>,
    } else {
    }
    %c0 = arith.constant 0 : index
    %c0_1 = arith.constant 0 : index
    %3 = vector.load %arg3[%c0, %c0_1] : memref<2x1xi32, #tpu.memory_space<vmem>>, vector<2x1xi32>
    %c1_i32 = arith.constant 1 : i32
    %4 = arith.muli %arg1, %c1_i32 : i32
    %5 = arith.addi %4, %arg2 : i32
    %c8_i32 = arith.constant 8 : i32
    %6 = arith.muli %5, %c8_i32 : i32
    %c0_i32_2 = arith.constant 0 : i32
    %c8_i32_3 = arith.constant 8 : i32
    %7 = arith.muli %c0_i32_2, %c8_i32_3 : i32
    %c0_4 = arith.constant 0 : index
    %c0_5 = arith.constant 0 : index
    %8 = arith.index_cast %7 : i32 to index
    %9 = vector.load %arg4[%c0_4, %c0_5, %8] : memref<2x29x8xf32, #tpu.memory_space<vmem>>, vector<2x29x8xf32>
    %cst = arith.constant dense<0xFF800000> : vector<2x8xf32>
    %10 = vector.multi_reduction <maximumf>, %9, %cst [1] : vector<2x29x8xf32> to vector<2x8xf32>
    %11 = vector.shape_cast %10 : vector<2x8xf32> to vector<2x1x8xf32>
    %12 = tpu.iota {dimensions = array<i32: 1>} : vector<1x29x1xi32>
    %13 = vector.broadcast %11 : vector<2x1x8xf32> to vector<2x29x8xf32>
    %14 = arith.cmpf oeq, %9, %13 : vector<2x29x8xf32>
    %c29_i32 = arith.constant 29 : i32
    %15 = vector.shape_cast %12 : vector<1x29x1xi32> to vector<1x29x1xi32>
    %16 = vector.broadcast %15 : vector<1x29x1xi32> to vector<2x29x8xi32>
    %17 = vector.broadcast %c29_i32 : i32 to vector<2x29x8xi32>
    %18 = arith.select %14, %16, %17 : vector<2x29x8xi1>, vector<2x29x8xi32>
    %cst_6 = arith.constant dense<2147483647> : vector<2x8xi32>
    %19 = vector.multi_reduction <minsi>, %18, %cst_6 [1] : vector<2x29x8xi32> to vector<2x8xi32>
    %c0_7 = arith.constant 0 : index
    %20 = arith.index_cast %7 : i32 to index
    %21 = vector.load %arg5[%c0_7, %20] : memref<2x8xi32, #tpu.memory_space<vmem>>, vector<2x8xi32>
    tpu.vector_store %arg5[%c0_7, %20], %19 {strides = array<i32>} : memref<2x8xi32, #tpu.memory_space<vmem>>, vector<2x8xi32>,
    %22 = vector.broadcast %11 : vector<2x1x8xf32> to vector<2x29x8xf32>
    %23 = arith.subf %9, %22 : vector<2x29x8xf32>
    %24 = math.exp %23 : vector<2x29x8xf32>
    %cst_8 = arith.constant dense<0.000000e+00> : vector<2x8xf32>
    %25 = vector.multi_reduction <add>, %24, %cst_8 [1] : vector<2x29x8xf32> to vector<2x8xf32>
    %26 = math.log %25 : vector<2x8xf32>
    %cst_9 = arith.constant 0.000000e+00 : f32
    %27 = vector.broadcast %cst_9 : f32 to vector<2x8xf32>
    %28 = arith.subf %27, %26 : vector<2x8xf32>
    %29 = arith.addi %6, %7 : i32
    %30 = tpu.iota {dimensions = array<i32: 1>} : vector<2x8xi32>
    %31 = vector.broadcast %29 : i32 to vector<2x8xi32>
    %32 = arith.addi %31, %30 : vector<2x8xi32>
    %33 = vector.broadcast %3 : vector<2x1xi32> to vector<2x8xi32>
    %34 = arith.cmpi slt, %32, %33 : vector<2x8xi32>
    %cst_10 = arith.constant 0.000000e+00 : f32
    %35 = vector.broadcast %cst_10 : f32 to vector<2x8xf32>
    %36 = arith.select %34, %28, %35 : vector<2x8xi1>, vector<2x8xf32>
    %cst_11 = arith.constant dense<0.000000e+00> : vector<2xf32>
    %37 = vector.multi_reduction <add>, %36, %cst_11 [1] : vector<2x8xf32> to vector<2xf32>
    %38 = vector.shape_cast %37 : vector<2xf32> to vector<2x1xf32>
    %c0_12 = arith.constant 0 : index
    %c0_13 = arith.constant 0 : index
    %c0_14 = arith.constant 0 : index
    %39 = vector.load %arg6[%c0_12, %c0_13, %c0_14] : memref<1x2x1xf32, #tpu.memory_space<vmem>>, vector<1x2x1xf32>
    %40 = vector.shape_cast %38 : vector<2x1xf32> to vector<1x2x1xf32>
    %41 = arith.addf %39, %40 : vector<1x2x1xf32>
    %c0_15 = arith.constant 0 : index
    %c0_16 = arith.constant 0 : index
    %c0_17 = arith.constant 0 : index
    %42 = vector.load %arg6[%c0_15, %c0_16, %c0_17] : memref<1x2x1xf32, #tpu.memory_space<vmem>>, vector<1x2x1xf32>
    tpu.vector_store %arg6[%c0_15, %c0_16, %c0_17], %41 {strides = array<i32>} : memref<1x2x1xf32, #tpu.memory_space<vmem>>, vector<1x2x1xf32>,
    %c1_i32_18 = arith.constant 1 : i32
    return
  }
  func.func @transform_0(%arg0: i32, %arg1: i32, %arg2: i32) -> (i32, i32) {
    %c0_i32 = arith.constant 0 : i32
    %c0_i32_0 = arith.constant 0 : i32
    return %arg0, %c0_i32 : i32, i32
  }
  func.func @transform_1(%arg0: i32, %arg1: i32, %arg2: i32) -> (i32, i32, i32) {
    %c1_i32 = arith.constant 1 : i32
    %0 = arith.muli %arg1, %c1_i32 : i32
    %1 = arith.addi %0, %arg2 : i32
    %c0_i32 = arith.constant 0 : i32
    %c0_i32_0 = arith.constant 0 : i32
    return %arg0, %c0_i32, %1 : i32, i32, i32
  }
  func.func @transform_2(%arg0: i32, %arg1: i32, %arg2: i32) -> (i32, i32) {
    %c1_i32 = arith.constant 1 : i32
    %0 = arith.muli %arg1, %c1_i32 : i32
    %1 = arith.addi %0, %arg2 : i32
    %c0_i32 = arith.constant 0 : i32
    return %arg0, %1 : i32, i32
  }
  func.func @transform_3(%arg0: i32, %arg1: i32, %arg2: i32) -> (i32, i32, i32) {
    %c0_i32 = arith.constant 0 : i32
    %c0_i32_0 = arith.constant 0 : i32
    return %arg1, %arg0, %c0_i32 : i32, i32, i32
  }
}

</mosaic_0001>

<llo_original>
// kernel: tpu_custom_call.1
$region0: #{tpu_custom_call.1}
  #allocation0 [shape = 'u32[]', space=smem, size = 0x4, offset = 0x4, fixed_abs, tag = 'smem constant byte address 0x4 - core index']
  #allocation1 [shape = 'u32[144,128]{1,0:T(1,128)}', space=vmem, size = 0x12000, scoped, tag = 'internal scratch']
  %s0 = inlined_call_operand.vmem [shape: s32[2,1], index: 0, kind: input, shape index: {}]
  %s1 = inlined_call_operand.vmem [shape: f32[2,29,8], index: 1, kind: input, shape index: {}]
  %s2 = inlined_call_operand.hbm [shape: s32[2,8], index: 2, kind: output, shape index: {0}]
  %s3 = inlined_call_operand.vmem [shape: f32[1,2,1], index: 3, kind: output, shape index: {1}]
  %4 = xla_tuple %s2, %s3
  %s5 = sld [smem:[#allocation0]]
  $region30: #{tpu_custom_call.1} parent=0
    _
  %s7 = ssub.s32 1, %s5
  %s8 = scalar_select 0, %s7, %s5
  $region1: #{tpu_custom_call.1} parent=0
    #allocation2 [shape = 'u8[1024]{0}', space=vmem, size = 0x400, scoped, tag = 'output window, operand 0, single buffered']
    #allocation3 [shape = 's32[1]{0}', space=sflag, size = 0x4, scoped, tag = 'scoped memory for tpu_custom_call.1']
    %9 = vsyncpa [#allocation3], 0
    // Predicated region
    $region2: #{tpu_custom_call.1} parent=1 // pred_check
      _
    $region3: #{tpu_custom_call.1} parent=1 // pred_check_branch
      %11 = sbr.rel (0) target = $region5
    $region4: #{tpu_custom_call.1} parent=1 // pred_region
      _
    $region5: #{tpu_custom_call.1} parent=1 // pred_fallthru
      _
    // Predicated region
    $region6: #{tpu_custom_call.1} parent=1 // pred_check
      _
    $region7: #{tpu_custom_call.1} parent=1 // pred_check_branch
      %13 = sbr.rel (0) target = $region9
    $region8: #{tpu_custom_call.1} parent=1 // pred_region
      %s14 = sadd.s32 0, 0
      %p15 = scmp.lt.s32.totalorder %s14, 0
      %s16 = scalar_select %p15, %s14, 0
      %s17 = smul.addr %s16, 8
      %s18 = scalar_lea.vmem %s1, %s17
      %s19 = sadd.s32 0, 0
    $region9: #{tpu_custom_call.1} parent=1 // pred_fallthru
      _
    %s20 = sadd.s32 0, 0
    %p21 = scmp.lt.s32.totalorder %s20, 0
    %s22 = scalar_select %p21, %s20, 0
    %s23 = smul.addr %s22, 8
    %s24 = scalar_lea.vmem %s1, %s23
    %s25 = sadd.s32 0, 0
    %p26 = scmp.lt.s32.totalorder %s25, 0
    %s27 = scalar_select %p26, %s25, 0
    %s28 = smul.addr %s27, 8
    %s29 = scalar_lea.vmem %s1, %s28
    %s30 = sadd.s32 0, 0
    %s31 = sadd.s32 0, 0
    %p32 = scmp.eq.s32.totalorder 0, 0
    // Predicated region
    $region10: #{tpu_custom_call.1} parent=1 // pred_check
      %p33 = pneg %p32
    $region11: #{tpu_custom_call.1} parent=1 // pred_check_branch
      %35 = sbr.rel (%p33) target = $region13
    $region12: #{tpu_custom_call.1} parent=1 // pred_region
      %vm36 = vcmask 1024
      %37 = vst.msk [vmem:[%s3] sm:$0x3] %vm36, 0.0
    $region13: #{tpu_custom_call.1} parent=1 // pred_fallthru
      _
    %v38 = vld [vmem:[%s0] sm:$0x3]
    %s39 = sadd.s32 0, 0
    %s40 = smul.u32 %s39, 8
    %v41 = vld [vmem:[%s29] sm:$0xff]
    %v42 = vld [vmem:[%s29 + $0x8] sm:$0xff]
    %v43 = vld [vmem:[%s29 + $0x10] sm:$0xff]
    %v44 = vld [vmem:[%s29 + $0x18] sm:$0x1f]
    %v45 = vld [vmem:[%s29 + $0x20] sm:$0xff]
    %v46 = vld [vmem:[%s29 + $0x28] sm:$0xff]
    %v47 = vld [vmem:[%s29 + $0x30] sm:$0xff]
    %v48 = vld [vmem:[%s29 + $0x38] sm:$0x1f]
    %vm49 = vcmask 64512
    %v50 = vsel %vm49, %v41, -inf
    %v51 = vsel %vm49, %v42, -inf
    %v52 = vsel %vm49, %v43, -inf
    %v53 = vmax.f32 %v50, %v52
    %vm54 = vcmask 61440
    %v55 = vsel %vm54, %v44, -inf
    %v56 = vmax.f32 %v51, %v55
    %v57 = vmax.f32 %v53, %v56
    %v58 = vrot.slane %v57, 4
    %v59 = vmax.f32 %v57, %v58
    %v60 = vrot.slane %v59, 2
    %v61 = vmax.f32 %v59, %v60
    %v62 = vrot.slane %v61, 1
    %v63 = vmax.f32 %v61, %v62
    %v64 = vsel %vm49, %v45, -inf
    %v65 = vsel %vm49, %v46, -inf
    %v66 = vsel %vm49, %v47, -inf
    %v67 = vmax.f32 %v64, %v66
    %v68 = vsel %vm54, %v48, -inf
    %v69 = vmax.f32 %v65, %v68
    %v70 = vmax.f32 %v67, %v69
    %v71 = vrot.slane %v70, 4
    %v72 = vmax.f32 %v70, %v71
    %v73 = vrot.slane %v72, 2
    %v74 = vmax.f32 %v72, %v73
    %v75 = vrot.slane %v74, 1
    %v76 = vmax.f32 %v74, %v75
    %v77 = vlaneseq
    %v78 = vshrl.u32 %v77, 7
    %v79 = vadd.s32 %v78, 8
    %v80 = vadd.s32 %v78, 16
    %v81 = vadd.s32 %v78, 24
    %vm82 = vcmp.eq.f32.partialorder %v41, %v63
    %vm83 = vcmp.eq.f32.partialorder %v42, %v63
    %vm84 = vcmp.eq.f32.partialorder %v43, %v63
    %vm85 = vcmp.eq.f32.partialorder %v44, %v63
    %vm86 = vcmp.eq.f32.partialorder %v45, %v76
    %vm87 = vcmp.eq.f32.partialorder %v46, %v76
    %vm88 = vcmp.eq.f32.partialorder %v47, %v76
    %vm89 = vcmp.eq.f32.partialorder %v48, %v76
    %v90 = vsel %vm82, %v78, 29
    %v91 = vsel %vm83, %v79, 29
    %v92 = vsel %vm84, %v80, 29
    %v93 = vsel %vm85, %v81, 29
    %v94 = vsel %vm86, %v78, 29
    %v95 = vsel %vm87, %v79, 29
    %v96 = vsel %vm88, %v80, 29
    %v97 = vsel %vm89, %v81, 29
    %v98 = vsel %vm49, %v90, 2147483647
    %v99 = vsel %vm49, %v91, 2147483647
    %v100 = vsel %vm49, %v92, 2147483647
    %vm101 = vcmp.lt.s32.totalorder %v98, %v100
    %v102 = vsel %vm101, %v98, %v100
    %v103 = vsel %vm54, %v93, 2147483647
    %vm104 = vcmp.lt.s32.totalorder %v99, %v103
    %v105 = vsel %vm104, %v99, %v103
    %vm106 = vcmp.lt.s32.totalorder %v102, %v105
    %v107 = vsel %vm106, %v102, %v105
    %v108 = vrot.slane %v107, 4
    %vm109 = vcmp.lt.s32.totalorder %v107, %v108
    %v110 = vsel %vm109, %v107, %v108
    %v111 = vrot.slane %v110, 2
    %vm112 = vcmp.lt.s32.totalorder %v110, %v111
    %v113 = vsel %vm112, %v110, %v111
    %v114 = vrot.slane %v113, 1
    %vm115 = vcmp.lt.s32.totalorder %v113, %v114
    %v116 = vsel %vm115, %v113, %v114
    %v117 = vsel %vm49, %v94, 2147483647
    %v118 = vsel %vm49, %v95, 2147483647
    %v119 = vsel %vm49, %v96, 2147483647
    %vm120 = vcmp.lt.s32.totalorder %v117, %v119
    %v121 = vsel %vm120, %v117, %v119
    %v122 = vsel %vm54, %v97, 2147483647
    %vm123 = vcmp.lt.s32.totalorder %v118, %v122
    %v124 = vsel %vm123, %v118, %v122
    %vm125 = vcmp.lt.s32.totalorder %v121, %v124
    %v126 = vsel %vm125, %v121, %v124
    %v127 = vrot.slane %v126, 4
    %vm128 = vcmp.lt.s32.totalorder %v126, %v127
    %v129 = vsel %vm128, %v126, %v127
    %v130 = vrot.slane %v129, 2
    %vm131 = vcmp.lt.s32.totalorder %v129, %v130
    %v132 = vsel %vm131, %v129, %v130
    %v133 = vrot.slane %v132, 1
    %vm134 = vcmp.lt.s32.totalorder %v132, %v133
    %v135 = vsel %vm134, %v132, %v133
    %vm136 = vcmask 1041409
    %v137 = vsel %vm136, %v135, %v116
    %vm138 = vcmask 58368
    %139 = vst.msk [vmem:[#allocation2] sm:$0x3] %vm138, %v137
    %v140 = vsub.f32 %v41, %v63
    %v141 = vsub.f32 %v42, %v63
    %v142 = vsub.f32 %v43, %v63
    %v143 = vsub.f32 %v44, %v63
    %v144 = vsub.f32 %v45, %v76
    %v145 = vsub.f32 %v46, %v76
    %v146 = vsub.f32 %v47, %v76
    %v147 = vsub.f32 %v48, %v76
    %v148 = vmul.f32 %v140, 1.442695
    %v149 = vpow.pop %v148
    %v150 = vmul.f32 %v141, 1.442695
    %v151 = vpow.pop %v150
    %v152 = vmul.f32 %v142, 1.442695
    %v153 = vpow.pop %v152
    %v154 = vmul.f32 %v143, 1.442695
    %v155 = vpow.pop %v154
    %v156 = vmul.f32 %v144, 1.442695
    %v157 = vpow.pop %v156
    %v158 = vmul.f32 %v145, 1.442695
    %v159 = vpow.pop %v158
    %v160 = vmul.f32 %v146, 1.442695
    %v161 = vpow.pop %v160
    %v162 = vmul.f32 %v147, 1.442695
    %v163 = vpow.pop %v162
    %v164 = vsel %vm49, %v149, 0.0
    %v165 = vsel %vm49, %v151, 0.0
    %v166 = vadd.f32 %v164, %v165
    %v167 = vsel %vm49, %v153, 0.0
    %v168 = vadd.f32 %v166, %v167
    %v169 = vsel %vm54, %v155, 0.0
    %v170 = vadd.f32 %v168, %v169
    %v171 = vrot.slane %v170, 4
    %v172 = vadd.f32 %v170, %v171
    %v173 = vrot.slane %v172, 2
    %v174 = vadd.f32 %v172, %v173
    %v175 = vrot.slane %v174, 1
    %v176 = vadd.f32 %v174, %v175
    %v177 = vsel %vm49, %v157, 0.0
    %v178 = vsel %vm49, %v159, 0.0
    %v179 = vadd.f32 %v177, %v178
    %v180 = vsel %vm49, %v161, 0.0
    %v181 = vadd.f32 %v179, %v180
    %v182 = vsel %vm54, %v163, 0.0
    %v183 = vadd.f32 %v181, %v182
    %v184 = vrot.slane %v183, 4
    %v185 = vadd.f32 %v183, %v184
    %v186 = vrot.slane %v185, 2
    %v187 = vadd.f32 %v185, %v186
    %v188 = vrot.slane %v187, 1
    %v189 = vadd.f32 %v187, %v188
    %v190 = vlog2.pop %v176
    %v191 = vmul.f32 %v190, 0.6931472
    %v192 = vlog2.pop %v189
    %v193 = vmul.f32 %v192, 0.6931472
    %v194 = vsub.f32 0.0, %v191
    %v195 = vsub.f32 0.0, %v193
    %v196 = vlaneseq
    %v197 = vand.u32 %v196, 127
    %v198 = vstv %s40
    %v199 = vadd.s32 %v198, %v197
    %200 = vset.pattern.permute.xlu0 0
    %201 = vperm.xlu0 %200, %v38
    %v202 = vpop.permute.xlu0 %201
    %vm203 = vcmp.lt.s32.totalorder %v199, %v202
    %v206 = vsel %vm136, %v195, %v194
    %v208 = vsel %vm203, %v206, 0.0
    %v209 = vsel %vm138, %v208, 0.0
    %210 = vadd.xlane.f32.xlu0 %v209
    %v211 = vpop.xlane.xlu0 %210
    %v212 = vld [vmem:[%s3] sm:$0x3]
    %v213 = vadd.f32 %v212, %v211
    %vm214 = vcmask 1024
    %215 = vst.msk [vmem:[%s3] sm:$0x3] %vm214, %v213
    // Predicated region
    $region14: #{tpu_custom_call.1} parent=1 // pred_check
      _
    $region15: #{tpu_custom_call.1} parent=1 // pred_check_branch
      %217 = sbr.rel (0) target = $region17
    $region16: #{tpu_custom_call.1} parent=1 // pred_region
      %s218 = sadd.s32 0, 0
      %s220 = ssub.s32 32, 32
      %221 = vsyncadd [#allocation3], %s220
      %s222 = smul.addr %s218, 32
      %s223 = scalar_lea.hbm %s2, %s222
      %s225 = sshll.u32 [#allocation2], 4
      %s226 = int_to_ptr.vmem [resolvable:$true] %s225
      %228 = dma.vmem_to_hbm [thread:$0]  %s226, 32, %s223, [#allocation3]
    $region17: #{tpu_custom_call.1} parent=1 // pred_fallthru
      _
    // Predicated region
    $region18: #{tpu_custom_call.1} parent=1 // pred_check
      _
    $region19: #{tpu_custom_call.1} parent=1 // pred_check_branch
      %230 = sbr.rel (0) target = $region21
    $region20: #{tpu_custom_call.1} parent=1 // pred_region
      _
    $region21: #{tpu_custom_call.1} parent=1 // pred_fallthru
      _
    // Predicated region
    $region22: #{tpu_custom_call.1} parent=1 // pred_check
      _
    $region23: #{tpu_custom_call.1} parent=1 // pred_check_branch
      %232 = sbr.rel (0) target = $region25
    $region24: #{tpu_custom_call.1} parent=1 // pred_region
      %233 = dma.done [#allocation3], 32
    $region25: #{tpu_custom_call.1} parent=1 // pred_fallthru
      _
    // Predicated region
    $region26: #{tpu_custom_call.1} parent=1 // pred_check
      _
    $region27: #{tpu_custom_call.1} parent=1 // pred_check_branch
      %235 = sbr.rel (0) target = $region29
    $region28: #{tpu_custom_call.1} parent=1 // pred_region
      _
    $region29: #{tpu_custom_call.1} parent=1 // pred_fallthru
      _
    %236 = vsyncpa [#allocation3], 1

</llo_original>
